<compile_context>
chip_gen: v6e
topology: v6e:2x2x1
jax: 0.10.0
libtpu: 0.0.40
codegen_flags: <defaults>
</compile_context>

<pallas_src>
import functools
import math

import jax
import jax.numpy as jnp
from jax import lax
from jax.experimental import pallas as pl
from jax.experimental.pallas import tpu as pltpu


# ----------------------------------------------------------------------------
# Helpers
# ----------------------------------------------------------------------------
def _round_up(x, m):
    return ((x + m - 1) // m) * m


def _pick_tile(padded, cap, step):
    """Largest multiple of `step`, <= cap, that divides `padded`."""
    best = step
    t = step
    while t <= min(cap, padded):
        if padded % t == 0:
            best = t
        t += step
    return best


def _vmem_limit_bytes():
    # Generation-aware: ~3/4 of physical VMEM, capped at 100 MiB.
    # v5e/v6e (128 MiB)  -> ~96-100 MiB;  v7x (64 MiB) -> 48 MiB.
    try:
        info = pltpu.get_tpu_info()
        cap = getattr(info, "vmem_capacity_bytes", None)
        if cap:
            return int(min(cap * 3 // 4, 100 * 1024 * 1024))
    except Exception:
        pass
    return 48 * 1024 * 1024


def _cparams(semantics):
    return pltpu.CompilerParams(
        dimension_semantics=semantics,
        vmem_limit_bytes=_vmem_limit_bytes(),
    )


# ----------------------------------------------------------------------------
# Kernels
# ----------------------------------------------------------------------------
def _backbone_kernel(x_ref, w_ref, b_ref, feat_ref, acc_ref):
    """feat_n = l2norm(relu(x @ w + b)); tiled over (batch, K) with f32 acc.

    x arrives from HBM in f32 (read exactly once) and is cast to bf16 for the
    MXU inside the kernel; accumulation is f32.
    """
    k = pl.program_id(1)

    @pl.when(k == 0)
    def _():
        acc_ref[...] = jnp.zeros_like(acc_ref)

    acc_ref[...] += jnp.dot(
        x_ref[...].astype(jnp.bfloat16), w_ref[...],
        preferred_element_type=jnp.float32)

    @pl.when(k == pl.num_programs(1) - 1)
    def _():
        y = jnp.maximum(acc_ref[...] + b_ref[...], 0.0)
        # Fuse the head's feature normalization here (done once per row).
        inv = lax.rsqrt(jnp.sum(y * y, axis=-1, keepdims=True) + 1e-12)
        feat_ref[...] = (y * inv).astype(feat_ref.dtype)


def _normalize_rows_kernel(w_ref, out_ref):
    """Row-wise L2 normalization of the class-weight matrix (one-time pass)."""
    w = w_ref[...].astype(jnp.float32)
    inv = lax.rsqrt(jnp.sum(w * w, axis=-1, keepdims=True) + 1e-12)
    out_ref[...] = (w * inv).astype(out_ref.dtype)


def _arcface_kernel(feat_ref, wn_ref, label_ref, logits_ref, cos_ref, *, s, m):
    """ArcFace head tile. Grid = (class_tiles, batch_tiles).

    feat_n:[TB,F] bf16 (pre-normalized), w_n:[TC,F] bf16 (pre-normalized),
    label:[TB,1] int32 -> logits:[TB,TC] bf16, cos_theta:[TB,TC] bf16.
    Margin math is restricted to the (single) target column per row; only the
    target cosine (which feeds sqrt) is clamped, keeping the per-element
    epilogue to a compare + select.
    """
    c = pl.program_id(0)

    # Contract the feature axis of both operands directly (no .T relayout).
    cos = lax.dot_general(
        feat_ref[...], wn_ref[...],
        dimension_numbers=(((1,), (1,)), ((), ())),
        preferred_element_type=jnp.float32)

    tb, tc = cos.shape
    labels = label_ref[...]  # [TB, 1] int32 (global class ids)
    class_ids = lax.broadcasted_iota(jnp.int32, (tb, tc), 1) + c * tc
    one_hot = class_ids == labels

    # Target cosine for each row, restricted to this class tile
    # (zero and unused when the target class lives in another tile).
    tgt = jnp.sum(jnp.where(one_hot, cos, 0.0), axis=-1, keepdims=True)  # [TB,1]
    tgt = jnp.clip(tgt, -1.0, 1.0)

    cos_m = math.cos(m)
    sin_m = math.sin(m)
    th = math.cos(math.pi - m)
    mm = math.sin(math.pi - m) * m
    sin_tgt = jnp.sqrt(jnp.maximum(1.0 - tgt * tgt, 0.0))
    tgt_margin = tgt * cos_m - sin_tgt * sin_m
    tgt_margin = jnp.where(tgt > th, tgt_margin, tgt - mm)  # [TB,1]

    logits_ref[...] = (s * jnp.where(one_hot, tgt_margin, cos)).astype(
        logits_ref.dtype)
    cos_ref[...] = cos.astype(cos_ref.dtype)


# ----------------------------------------------------------------------------
# Wrappers (pallas_call plumbing)
# ----------------------------------------------------------------------------
def backbone_forward(x_flat, w, b, *, tb, tk):
    """Returns L2-normalized features, bf16, padded batch."""
    b_pad, din_pad = x_flat.shape
    f_pad = w.shape[1]
    grid = (b_pad // tb, din_pad // tk)
    return pl.pallas_call(
        _backbone_kernel,
        out_shape=jax.ShapeDtypeStruct((b_pad, f_pad), jnp.bfloat16),
        grid=grid,
        in_specs=[
            pl.BlockSpec((tb, tk), lambda i, k: (i, k)),
            # When tk == din_pad this index is constant -> weight DMA'd once
            # and resident across all batch tiles.
            pl.BlockSpec((tk, f_pad), lambda i, k: (k, 0)),
            pl.BlockSpec((1, f_pad), lambda i, k: (0, 0)),
        ],
        out_specs=pl.BlockSpec((tb, f_pad), lambda i, k: (i, 0)),
        scratch_shapes=[pltpu.VMEM((tb, f_pad), jnp.float32)],
        compiler_params=_cparams(("parallel", "arbitrary")),
    )(x_flat, w, b)


def normalize_head_weights(w_head, *, tc):
    """One-time row normalization of [C,F] class weights -> bf16."""
    c_pad, f_pad = w_head.shape
    return pl.pallas_call(
        _normalize_rows_kernel,
        out_shape=jax.ShapeDtypeStruct((c_pad, f_pad), jnp.bfloat16),
        grid=(c_pad // tc,),
        in_specs=[pl.BlockSpec((tc, f_pad), lambda i: (i, 0))],
        out_specs=pl.BlockSpec((tc, f_pad), lambda i: (i, 0)),
        compiler_params=_cparams(("parallel",)),
    )(w_head)


def arcface_forward(feat_n, w_n, label2d, *, s, m, tb, tc):
    b_pad, f_pad = feat_n.shape
    c_pad = w_n.shape[0]
    # Class axis OUTER so w_n (the large operand) stays resident across the
    # inner batch loop; only the tiny feat/label tiles are re-streamed.
    grid = (c_pad // tc, b_pad // tb)
    kernel = functools.partial(_arcface_kernel, s=s, m=m)
    return pl.pallas_call(
        kernel,
        out_shape=(
            jax.ShapeDtypeStruct((b_pad, c_pad), jnp.bfloat16),
            jax.ShapeDtypeStruct((b_pad, c_pad), jnp.bfloat16),
        ),
        grid=grid,
        in_specs=[
            pl.BlockSpec((tb, f_pad), lambda c, i: (i, 0)),
            pl.BlockSpec((tc, f_pad), lambda c, i: (c, 0)),
            pl.BlockSpec((tb, 1), lambda c, i: (i, 0)),
        ],
        out_specs=(
            pl.BlockSpec((tb, tc), lambda c, i: (i, c)),
            pl.BlockSpec((tb, tc), lambda c, i: (i, c)),
        ),
        compiler_params=_cparams(("parallel", "parallel")),
    )(feat_n, w_n, label2d)


def face_model_teacher_forward(params, data, label, *, s=64.0, m=0.5):
    """Mirrors FaceModel_teacher.forward(data, label) -> (arcface_out, cos_theta)."""
    batch = data.shape[0]
    x_flat = data.reshape(batch, -1)  # NCHW row-major flatten == torch .view(B,-1)
    din = x_flat.shape[1]
    feat_dim = params["w_backbone"].shape[1]
    num_classes = params["w_head"].shape[0]

    # --- adaptive tile sizes -------------------------------------------------
    f_pad = _round_up(feat_dim, 128)

    # Batch: multiple of 16 (dense bf16 sublane packing), tile up to 256 that
    # divides the padded batch (no over-padding for awkward batch sizes).
    b_pad = _round_up(batch, 16)
    tb = _pick_tile(b_pad, 256, 16)
    # Keep >=2 parallel batch tiles when the batch allows (both v7x TCs busy).
    if b_pad // tb < 2 and b_pad >= 32 and (b_pad // 2) % 16 == 0:
        tb = b_pad // 2

    # Backbone K: drop the K grid axis (weight resident in VMEM) whenever the
    # bf16 weight is small; otherwise tile K at 512.
    if din * f_pad * 2 <= (4 << 20):
        tk = din
        din_pad = din
    else:
        tk = 512
        din_pad = _round_up(din, tk)

    # Classes: single big tile for small heads; otherwise a 512-2048 tile that
    # divides the 128-rounded class count, falling back to 1024 with padding.
    c_pad = _round_up(num_classes, 128)
    if c_pad <= 2048:
        tc = c_pad
    else:
        tc = _pick_tile(c_pad, 2048, 128)
        if tc < 512:
            tc = 1024
            c_pad = _round_up(num_classes, tc)

    # --- pad only when necessary (x stays f32; cast to bf16 inside kernel) --
    x_p = x_flat
    if (b_pad, din_pad) != (batch, din):
        x_p = jnp.pad(x_flat, ((0, b_pad - batch), (0, din_pad - din)))
    x_p = x_p.astype(jnp.float32)

    w_bb = params["w_backbone"]
    if (din_pad, f_pad) != w_bb.shape:
        w_bb = jnp.pad(w_bb, ((0, din_pad - din), (0, f_pad - feat_dim)))
    w_bb = w_bb.astype(jnp.bfloat16)

    b_bb = params["b_backbone"]
    if b_bb.shape[1] != f_pad:
        b_bb = jnp.pad(b_bb, ((0, 0), (0, f_pad - feat_dim)))
    b_bb = b_bb.astype(jnp.float32)

    w_hd = params["w_head"]
    if (c_pad, f_pad) != w_hd.shape:
        w_hd = jnp.pad(w_hd, ((0, c_pad - num_classes), (0, f_pad - feat_dim)))
    w_hd = w_hd.astype(jnp.float32)

    label2d = jnp.pad(label.astype(jnp.int32), (0, b_pad - batch)).reshape(b_pad, 1)

    # --- pipeline: backbone (+feat norm) -> w norm (once) -> ArcFace head ---
    feat_n = backbone_forward(x_p, w_bb, b_bb, tb=tb, tk=tk)
    # NOTE: w_n is purely a function of the (static) head weights; callers
    # doing repeated forwards should cache this across steps.
    w_n = normalize_head_weights(w_hd, tc=tc)
    logits_p, cos_p = arcface_forward(feat_n, w_n, label2d, s=s, m=m, tb=tb, tc=tc)

    return logits_p[:batch, :num_classes], cos_p[:batch, :num_classes]


# ----------------------------------------------------------------------------
# Pure-JAX reference (f32) for a sanity check
# ----------------------------------------------------------------------------
def reference_forward(params, data, label, *, s=64.0, m=0.5):
    x = data.reshape(data.shape[0], -1)
    feat = jnp.maximum(x @ params["w_backbone"] + params["b_backbone"], 0.0)
    feat_n = feat / jnp.maximum(
        jnp.linalg.norm(feat, axis=-1, keepdims=True), 1e-12)
    w = params["w_head"]
    w_n = w / jnp.maximum(jnp.linalg.norm(w, axis=-1, keepdims=True), 1e-12)
    cos = jnp.clip(feat_n @ w_n.T, -1.0, 1.0)
    sin = jnp.sqrt(jnp.maximum(1.0 - cos * cos, 0.0))
    cos_m = cos * math.cos(m) - sin * math.sin(m)
    th = math.cos(math.pi - m)
    mm = math.sin(math.pi - m) * m
    cos_m = jnp.where(cos > th, cos_m, cos - mm)
    one_hot = jax.nn.one_hot(label, cos.shape[1], dtype=jnp.bool_)
    logits = s * jnp.where(one_hot, cos_m, cos)
    return logits, cos


# ----------------------------------------------------------------------------
# Parameter init (deterministic, synthetic)
# ----------------------------------------------------------------------------
def init_params(key, in_dim, feat_dim, num_classes):
    k1, k2 = jax.random.split(key, 2)
    w_backbone = jax.random.normal(k1, (in_dim, feat_dim), jnp.float32) * 0.02
    b_backbone = jnp.zeros((1, feat_dim), jnp.float32)
    w_head = jax.random.normal(k2, (num_classes, feat_dim), jnp.float32) * 0.02
    return {"w_backbone": w_backbone, "b_backbone": b_backbone, "w_head": w_head}


if __name__ == "__main__":
    key = jax.random.PRNGKey(0)
    k_data, k_label, k_param = jax.random.split(key, 3)

    # Small demo shapes chosen so the grids actually tile:
    #   batch 24 -> b_pad 32 -> two 16-row batch tiles (parallel axis >= 2),
    #   classes 3072 -> two 1536-column class tiles in the head.
    B, C_in, H, W = 24, 3, 16, 16
    feat_dim = 128
    num_classes = 3072
    in_dim = C_in * H * W

    data = jax.random.normal(k_data, (B, C_in, H, W), jnp.float32)  # NCHW
    label = jax.random.randint(k_label, (B,), 0, num_classes, jnp.int32)
    params = init_params(k_param, in_dim, feat_dim, num_classes)

    arcface_outputs, cos_theta_teacher = face_model_teacher_forward(
        params, data, label)
    jax.block_until_ready((arcface_outputs, cos_theta_teacher))

    assert arcface_outputs.shape == (B, num_classes)
    assert cos_theta_teacher.shape == (B, num_classes)

    # Loose-tolerance sanity check against f32 reference (kernel uses bf16 MXU
    # operands with f32 accumulation; outputs are bf16).
    ref_logits, ref_cos = reference_forward(params, data, label)
    cos_err = float(jnp.max(jnp.abs(cos_theta_teacher.astype(jnp.float32) - ref_cos)))
    log_err = float(jnp.max(jnp.abs(arcface_outputs.astype(jnp.float32) - ref_logits)))
    assert cos_err < 0.03, f"cos_theta mismatch: {cos_err}"
    assert log_err < 2.0, f"logits mismatch: {log_err}"
    assert bool(jnp.all(jnp.isfinite(arcface_outputs.astype(jnp.float32))))

    print("KERNEL_OK")
</pallas_src>

<mosaic_0001>
module attributes {stable_mosaic.version = 11 : i64} {
  func.func @_backbone_kernel(%arg0: i32, %arg1: i32, %arg2: memref<16x768xf32, #tpu.memory_space<vmem>>, %arg3: memref<768x128xbf16, #tpu.memory_space<vmem>>, %arg4: memref<1x128xf32, #tpu.memory_space<vmem>>, %arg5: memref<16x128xbf16, #tpu.memory_space<vmem>>, %arg6: memref<16x128xf32, #tpu.memory_space<vmem>>) attributes {dimension_semantics = [#tpu.dimension_semantics<parallel>, #tpu.dimension_semantics<arbitrary>], iteration_bounds = array<i64: 2, 1>, scalar_prefetch = 0 : i64, scratch_operands = 1 : i64, tpu.core_type = #tpu.core_type<tc>, window_params = [{transform_indices = @transform_0, window_bounds = array<i64: 16, 768>}, {transform_indices = @transform_1, window_bounds = array<i64: 768, 128>}, {pipeline_mode = #tpu.pipeline_mode<synchronous>, transform_indices = @transform_2, window_bounds = array<i64: 1, 128>}, {transform_indices = @transform_3, window_bounds = array<i64: 16, 128>}]} {
    %c0_i32 = arith.constant 0 : i32
    %0 = arith.cmpi eq, %arg1, %c0_i32 : i32
    %1 = arith.extui %0 : i1 to i32
    %c0_i32_0 = arith.constant 0 : i32
    %2 = arith.cmpi ne, %1, %c0_i32_0 : i32
    scf.if %2 {
      %cst_10 = arith.constant 0.000000e+00 : f32
      %13 = vector.broadcast %cst_10 : f32 to vector<16x128xf32>
      %c0_11 = arith.constant 0 : index
      %c0_12 = arith.constant 0 : index
      %14 = vector.load %arg6[%c0_11, %c0_12] : memref<16x128xf32, #tpu.memory_space<vmem>>, vector<16x128xf32>
      tpu.vector_store %arg6[%c0_11, %c0_12], %13 {strides = array<i32>} : memref<16x128xf32, #tpu.memory_space<vmem>>, vector<16x128xf32>,
    } else {
    }
    %c0 = arith.constant 0 : index
    %c0_1 = arith.constant 0 : index
    %3 = vector.load %arg6[%c0, %c0_1] : memref<16x128xf32, #tpu.memory_space<vmem>>, vector<16x128xf32>
    %c0_2 = arith.constant 0 : index
    %c0_3 = arith.constant 0 : index
    %4 = vector.load %arg2[%c0_2, %c0_3] : memref<16x768xf32, #tpu.memory_space<vmem>>, vector<16x768xf32>
    %5 = arith.truncf %4 : vector<16x768xf32> to vector<16x768xbf16>
    %c0_4 = arith.constant 0 : index
    %c0_5 = arith.constant 0 : index
    %6 = vector.load %arg3[%c0_4, %c0_5] : memref<768x128xbf16, #tpu.memory_space<vmem>>, vector<768x128xbf16>
    %cst = arith.constant dense<0.000000e+00> : vector<16x128xf32>
    %7 = tpu.matmul %5, %6, %cst {dimension_numbers = #tpu.dot_dimension_numbers<[1], [0], [0], [1], [0, 0, 1, 1], [], []>} : vector<16x768xbf16>, vector<768x128xbf16>, vector<16x128xf32> -> vector<16x128xf32>
    %8 = arith.addf %3, %7 : vector<16x128xf32>
    %c0_6 = arith.constant 0 : index
    %c0_7 = arith.constant 0 : index
    %9 = vector.load %arg6[%c0_6, %c0_7] : memref<16x128xf32, #tpu.memory_space<vmem>>, vector<16x128xf32>
    tpu.vector_store %arg6[%c0_6, %c0_7], %8 {strides = array<i32>} : memref<16x128xf32, #tpu.memory_space<vmem>>, vector<16x128xf32>,
    %c0_i32_8 = arith.constant 0 : i32
    %10 = arith.cmpi eq, %arg1, %c0_i32_8 : i32
    %11 = arith.extui %10 : i1 to i32
    %c0_i32_9 = arith.constant 0 : i32
    %12 = arith.cmpi ne, %11, %c0_i32_9 : i32
    scf.if %12 {
      %c0_10 = arith.constant 0 : index
      %c0_11 = arith.constant 0 : index
      %13 = vector.load %arg6[%c0_10, %c0_11] : memref<16x128xf32, #tpu.memory_space<vmem>>, vector<16x128xf32>
      %c0_12 = arith.constant 0 : index
      %c0_13 = arith.constant 0 : index
      %14 = vector.load %arg4[%c0_12, %c0_13] : memref<1x128xf32, #tpu.memory_space<vmem>>, vector<1x128xf32>
      %15 = vector.broadcast %14 : vector<1x128xf32> to vector<16x128xf32>
      %16 = arith.addf %13, %15 : vector<16x128xf32>
      %cst_14 = arith.constant 0.000000e+00 : f32
      %17 = vector.broadcast %cst_14 : f32 to vector<16x128xf32>
      %18 = arith.maximumf %16, %17 : vector<16x128xf32>
      %19 = arith.mulf %18, %18 : vector<16x128xf32>
      %cst_15 = arith.constant dense<0.000000e+00> : vector<16xf32>
      %20 = vector.multi_reduction <add>, %19, %cst_15 [1] : vector<16x128xf32> to vector<16xf32>
      %21 = vector.shape_cast %20 : vector<16xf32> to vector<16x1xf32>
      %cst_16 = arith.constant 9.99999996E-13 : f32
      %22 = vector.broadcast %cst_16 : f32 to vector<16x1xf32>
      %23 = arith.addf %21, %22 : vector<16x1xf32>
      %24 = math.rsqrt %23 : vector<16x1xf32>
      %25 = vector.broadcast %24 : vector<16x1xf32> to vector<16x128xf32>
      %26 = arith.mulf %18, %25 : vector<16x128xf32>
      %27 = arith.truncf %26 : vector<16x128xf32> to vector<16x128xbf16>
      %c0_17 = arith.constant 0 : index
      %c0_18 = arith.constant 0 : index
      %28 = vector.load %arg5[%c0_17, %c0_18] : memref<16x128xbf16, #tpu.memory_space<vmem>>, vector<16x128xbf16>
      tpu.vector_store %arg5[%c0_17, %c0_18], %27 {strides = array<i32>} : memref<16x128xbf16, #tpu.memory_space<vmem>>, vector<16x128xbf16>,
    } else {
    }
    return
  }
  func.func @transform_0(%arg0: i32, %arg1: i32) -> (i32, i32) {
    %c0_i32 = arith.constant 0 : i32
    return %arg0, %arg1 : i32, i32
  }
  func.func @transform_1(%arg0: i32, %arg1: i32) -> (i32, i32) {
    %c0_i32 = arith.constant 0 : i32
    %c0_i32_0 = arith.constant 0 : i32
    return %arg1, %c0_i32 : i32, i32
  }
  func.func @transform_2(%arg0: i32, %arg1: i32) -> (i32, i32) {
    %c0_i32 = arith.constant 0 : i32
    %c0_i32_0 = arith.constant 0 : i32
    %c0_i32_1 = arith.constant 0 : i32
    return %c0_i32, %c0_i32_0 : i32, i32
  }
  func.func @transform_3(%arg0: i32, %arg1: i32) -> (i32, i32) {
    %c0_i32 = arith.constant 0 : i32
    %c0_i32_0 = arith.constant 0 : i32
    return %arg0, %c0_i32 : i32, i32
  }
}

</mosaic_0001>

<llo_original>
// kernel: tpu_custom_call.1
$region0: #{tpu_custom_call.1}
  #allocation0 [shape = 'u32[]', space=smem, size = 0x4, offset = 0x4, fixed_abs, tag = 'smem constant byte address 0x4 - core index']
  #allocation1 [shape = 'u32[144,128]{1,0:T(1,128)}', space=vmem, size = 0x12000, scoped, tag = 'internal scratch']
  #allocation2 [shape = 'f32[16,128]{1,0:T(8,128)}', space=vmem, size = 0x2000, scoped, tag = 'scratch operand']
  %s0 = inlined_call_operand.hbm [shape: f32[32,768], index: 0, kind: input, shape index: {}]
  %s1 = inlined_call_operand.hbm [shape: bf16[768,128], index: 1, kind: input, shape index: {}]
  %s2 = inlined_call_operand.vmem [shape: f32[1,128], index: 2, kind: input, shape index: {}]
  %s3 = inlined_call_operand.hbm [shape: bf16[32,128], index: 3, kind: output, shape index: {}]
  %s4 = sld [smem:[#allocation0]]
  $region61: #{tpu_custom_call.1} parent=0
    _
  %s6 = ssub.s32 1, %s4
  %s7 = scalar_select 0, %s6, %s4
  $region1: #{tpu_custom_call.1} parent=0
    #allocation3 [shape = 'u8[98304]{0}', space=vmem, size = 0x18000, scoped, tag = 'input window, operand 0']
    #allocation4 [shape = 's32[2]{0}', space=sflag, size = 0x8, scoped, tag = 'scoped memory for tpu_custom_call.1']
    #allocation5 [shape = 's32[2]{0}', space=sflag, size = 0x8, scoped, tag = 'scoped memory for tpu_custom_call.1']
    #allocation6 [shape = 'u8[196608]{0}', space=vmem, size = 0x30000, scoped, tag = 'input window, operand 1, single buffered']
    #allocation7 [shape = 's32[1]{0}', space=sflag, size = 0x4, scoped, tag = 'scoped memory for tpu_custom_call.1']
    #allocation8 [shape = 'u8[8192]{0}', space=vmem, size = 0x2000, scoped, tag = 'output window, operand 0']
    %8 = vsyncpa [#allocation4], 0
    %s9 = scalar_lea.sflag [#allocation4], 1
    %10 = vsyncpa %s9, 0
    %11 = vsyncpa [#allocation7], 0
    %12 = vsyncpa [#allocation5], 0
    %s13 = scalar_lea.sflag [#allocation5], 1
    %14 = vsyncpa %s13, 0
    loop: start=0, step=1, limit=4
    $region2: #{tpu_custom_call.1} parent=1 // loop_pre_header
      _
    $region3: #{tpu_custom_call.1} parent=1 // loop_header
      %s16 = sphi 0, %s20
      %p17 = scmp.ge.s32.totalorder %s16, 4
      %s23 = sphi 0, %s35
      %s24 = sphi 0, %s31
      %s25 = sphi 0, %s23
      %s26 = sphi 0, %s24
      %s27 = sphi 0, %s25
      %s28 = sphi 0, %s26
      %s40 = sphi 0, %s42
      %s43 = sphi 0, %s40
      %s44 = sphi 0, %s43
      %s60 = sphi 0, %s44
      %s66 = sphi 0, %s68
      %s69 = sphi 0, %s66
      %s70 = sphi 0, %s69
      %s86 = sphi 0, %s70
      %s90 = sphi 0, %s90
      %s92 = sphi 0, %s90
      %s93 = sphi 0, %s92
      %s107 = sphi 0, %s93
      %s113 = sphi 0, %s115
      %s116 = sphi 0, %s113
      %s117 = sphi 0, %s116
      %s133 = sphi 0, %s117
    $region4: #{tpu_custom_call.1} parent=1 // loop_header_branch
      %19 = sbr.rel (%p17) target = $region8
    $region5: #{tpu_custom_call.1} parent=1 // loop_body
      %s21 = ssub.s32 %s16, 1
      %s22 = ssub.s32 %s16, 2
      %s29 = sadd.s32 1, %s24
      %p30 = scmp.ge.s32.totalorder %s29, 1
      %s31 = scalar_select %p30, 0, %s29
      %s32 = sadd.s32 1, %s23
      %s33 = scalar_select %p30, %s32, %s23
      %p34 = scmp.ge.s32.totalorder %s33, 2
      %s35 = scalar_select %p34, 0, %s33
      %s36 = ssub.s32 %s23, %s35
      %s37 = ssub.s32 %s24, %s31
      %s38 = sor.u32 %s36, %s37
      %p39 = scmp.eq.s32.totalorder %s38, 0
      %s41 = sadd.s32 %s40, 1
      %s42 = scalar_select %p39, %s40, %s41
      %p45 = pneg %p39
      %p46 = scmp.eq.s32.totalorder %s16, 1
      %p47 = por %p45, %p46
      %p48 = scmp.ne.s32.totalorder %s40, %s43
      %p49 = scmp.eq.s32.totalorder %s16, 0
      %p50 = por %p48, %p49
      %p51 = scmp.ne.s32.totalorder %s40, %s43
      %p52 = scmp.eq.s32.totalorder %s21, 1
      %p53 = por %p51, %p52
      %p54 = scmp.ne.s32.totalorder %s43, %s44
      %p55 = scmp.eq.s32.totalorder %s21, 0
      %p56 = por %p54, %p55
      %p57 = scmp.ne.s32.totalorder %s43, %s44
      %p58 = scmp.eq.s32.totalorder %s22, 1
      %p59 = por %p57, %p58
      %p61 = scmp.ne.s32.totalorder %s44, %s60
      %p62 = scmp.eq.s32.totalorder %s22, 0
      %p63 = por %p61, %p62
      %s64 = ssub.s32 %s24, %s31
      %p65 = scmp.eq.s32.totalorder %s64, 0
      %s67 = sadd.s32 %s66, 1
      %s68 = scalar_select %p65, %s66, %s67
      %p71 = pneg %p65
      %p72 = scmp.eq.s32.totalorder %s16, 1
      %p73 = por %p71, %p72
      %p74 = scmp.ne.s32.totalorder %s66, %s69
      %p75 = scmp.eq.s32.totalorder %s16, 0
      %p76 = por %p74, %p75
      %p77 = scmp.ne.s32.totalorder %s66, %s69
      %p78 = scmp.eq.s32.totalorder %s21, 1
      %p79 = por %p77, %p78
      %p80 = scmp.ne.s32.totalorder %s69, %s70
      %p81 = scmp.eq.s32.totalorder %s21, 0
      %p82 = por %p80, %p81
      %p83 = scmp.ne.s32.totalorder %s69, %s70
      %p84 = scmp.eq.s32.totalorder %s22, 1
      %p85 = por %p83, %p84
      %p87 = scmp.ne.s32.totalorder %s70, %s86
      %p88 = scmp.eq.s32.totalorder %s22, 0
      %p89 = por %p87, %p88
      %s91 = sadd.s32 %s90, 1
      %p94 = scmp.eq.s32.totalorder %s16, 1
      %p95 = scmp.ne.s32.totalorder %s90, %s92
      %p96 = scmp.eq.s32.totalorder %s16, 0
      %p97 = por %p95, %p96
      %p98 = scmp.ne.s32.totalorder %s90, %s92
      %p99 = scmp.eq.s32.totalorder %s21, 1
      %p100 = por %p98, %p99
      %p101 = scmp.ne.s32.totalorder %s92, %s93
      %p102 = scmp.eq.s32.totalorder %s21, 0
      %p103 = por %p101, %p102
      %p104 = scmp.ne.s32.totalorder %s92, %s93
      %p105 = scmp.eq.s32.totalorder %s22, 1
      %p106 = por %p104, %p105
      %p108 = scmp.ne.s32.totalorder %s93, %s107
      %p109 = scmp.eq.s32.totalorder %s22, 0
      %p110 = por %p108, %p109
      %s111 = ssub.s32 %s23, %s35
      %p112 = scmp.eq.s32.totalorder %s111, 0
      %s114 = sadd.s32 %s113, 1
      %s115 = scalar_select %p112, %s113, %s114
      %p118 = pneg %p112
      %p119 = scmp.eq.s32.totalorder %s16, 1
      %p120 = por %p118, %p119
      %p121 = scmp.ne.s32.totalorder %s113, %s116
      %p122 = scmp.eq.s32.totalorder %s16, 0
      %p123 = por %p121, %p122
      %p124 = scmp.ne.s32.totalorder %s113, %s116
      %p125 = scmp.eq.s32.totalorder %s21, 1
      %p126 = por %p124, %p125
      %p127 = scmp.ne.s32.totalorder %s116, %s117
      %p128 = scmp.eq.s32.totalorder %s21, 0
      %p129 = por %p127, %p128
      %p130 = scmp.ne.s32.totalorder %s116, %s117
      %p131 = scmp.eq.s32.totalorder %s22, 1
      %p132 = por %p130, %p131
      %p134 = scmp.ne.s32.totalorder %s117, %s133
      %p135 = scmp.eq.s32.totalorder %s22, 0
      %p136 = por %p134, %p135
      %p137 = scmp.le.s32.totalorder 1, %s16
      %p138 = scmp.lt.s32.totalorder %s16, 3
      %p139 = pnand %p137, %p138
      %p140 = pneg %p139
      // Predicated region
      $region9: #{tpu_custom_call.1} parent=5 // pred_check
        _
      $region10: #{tpu_custom_call.1} parent=5 // pred_check_branch
        %142 = sbr.rel (%p139) target = $region12
      $region11: #{tpu_custom_call.1} parent=5 // pred_region
        %s143 = ssub.s32 %s16, 1
        // Predicated region
        $region13: #{tpu_custom_call.1} parent=11 // pred_check
          %p144 = pneg %p82
        $region14: #{tpu_custom_call.1} parent=11 // pred_check_branch
          %146 = sbr.rel (%p144) target = $region16
        $region15: #{tpu_custom_call.1} parent=11 // pred_region
          %s147 = smul.u32 96, %s26
          %s149 = ssub.s32 6144, 6144
          %150 = vsyncadd [#allocation7], %s149
          %s151 = smul.addr %s147, 64
          %s152 = scalar_lea.hbm %s1, %s151
          %s153 = sshll.u32 [#allocation6], 4
          %s154 = int_to_ptr.vmem [resolvable:$true] %s153
          %159 = dma.hbm_to_vmem [thread:$0]  %s152, 6144, %s154, [#allocation7], 64, 64, 4
        $region16: #{tpu_custom_call.1} parent=11 // pred_fallthru
          _
        // Predicated region
        $region17: #{tpu_custom_call.1} parent=11 // pred_check
          %p160 = pneg %p103
        $region18: #{tpu_custom_call.1} parent=11 // pred_check_branch
          %162 = sbr.rel (%p160) target = $region20
        $region19: #{tpu_custom_call.1} parent=11 // pred_region
          _
        $region20: #{tpu_custom_call.1} parent=11 // pred_fallthru
          _
      $region12: #{tpu_custom_call.1} parent=5 // pred_fallthru
        _
      %p163 = scmp.lt.s32.totalorder %s16, 2
      // Predicated region
      $region21: #{tpu_custom_call.1} parent=5 // pred_check
        %p164 = pneg %p163
      $region22: #{tpu_custom_call.1} parent=5 // pred_check_branch
        %166 = sbr.rel (%p164) target = $region24
      $region23: #{tpu_custom_call.1} parent=5 // pred_region
        // Predicated region
        $region25: #{tpu_custom_call.1} parent=23 // pred_check
          %p167 = pneg %p50
        $region26: #{tpu_custom_call.1} parent=23 // pred_check_branch
          %169 = sbr.rel (%p167) target = $region28
        $region27: #{tpu_custom_call.1} parent=23 // pred_region
          %s170 = sand.u32 %s40, 1
          %s171 = scalar_lea.sflag [#allocation4], %s170
          %s172 = sand.u32 %s40, 1
          %s173 = smul.addr %s172, 96
          %s174 = scalar_lea.vmem [#allocation3], %s173
          %s175 = smul.u32 2, %s23
          %s176 = smul.u32 6, %s24
          %s178 = ssub.s32 1536, 1536
          %179 = vsyncadd %s171, %s178
          %s180 = smul.addr %s175, 6
          %s181 = sadd.s32 %s176, %s180
          %s182 = smul.addr %s181, 128
          %s183 = scalar_lea.hbm %s0, %s182
          %s184 = sshll.u32 %s174, 4
          %s185 = int_to_ptr.vmem [resolvable:$true] %s184
          %190 = dma.hbm_to_vmem [thread:$0]  %s183, 1536, %s185, %s171, 768, 768, 48
        $region28: #{tpu_custom_call.1} parent=23 // pred_fallthru
          _
      $region24: #{tpu_custom_call.1} parent=5 // pred_fallthru
        _
      %p191 = scmp.le.s32.totalorder 1, %s16
      %p192 = scmp.lt.s32.totalorder %s16, 3
      %p193 = pnand %p191, %p192
      %p194 = pneg %p193
      // Predicated region
      $region29: #{tpu_custom_call.1} parent=5 // pred_check
        _
      $region30: #{tpu_custom_call.1} parent=5 // pred_check_branch
        %196 = sbr.rel (%p193) target = $region32
      $region31: #{tpu_custom_call.1} parent=5 // pred_region
        %s197 = ssub.s32 %s16, 1
        %s198 = sand.u32 %s43, 1
        %s199 = scalar_lea.sflag [#allocation4], %s198
        %s200 = sand.u32 %s43, 1
        %s201 = smul.addr %s200, 96
        %s202 = scalar_lea.vmem [#allocation3], %s201
        // Predicated region
        $region33: #{tpu_custom_call.1} parent=31 // pred_check
          %p203 = pneg %p56
        $region34: #{tpu_custom_call.1} parent=31 // pred_check_branch
          %205 = sbr.rel (%p203) target = $region36
        $region35: #{tpu_custom_call.1} parent=31 // pred_region
          %206 = dma.done %s199, 1536
        $region36: #{tpu_custom_call.1} parent=31 // pred_fallthru
          _
        // Predicated region
        $region37: #{tpu_custom_call.1} parent=31 // pred_check
          %p207 = pneg %p82
        $region38: #{tpu_custom_call.1} parent=31 // pred_check_branch
          %209 = sbr.rel (%p207) target = $region40
        $region39: #{tpu_custom_call.1} parent=31 // pred_region
          %210 = dma.done [#allocation7], 6144
        $region40: #{tpu_custom_call.1} parent=31 // pred_fallthru
          _
        %s211 = sand.u32 %s43, 1
        %s212 = scalar_lea.sflag [#allocation4], %s211
        %s213 = sand.u32 %s43, 1
        %s214 = smul.addr %s213, 96
        %s215 = scalar_lea.vmem [#allocation3], %s214
        %p216 = pneg %p56
        %p217 = pneg %p53
        %p218 = pneg %p82
        %p219 = pneg %p79
        %p220 = pneg %p103
        %p221 = pneg %p100
        %p222 = pneg %p129
        %p223 = pneg %p126
        %s224 = sand.u32 %s116, 1
        %s225 = scalar_lea.sflag [#allocation5], %s224
        %s226 = sand.u32 %s116, 1
        %s227 = smul.addr %s226, 8
        %s228 = scalar_lea.vmem [#allocation8], %s227
        %s229 = smul.u32 2, %s25
        %s230 = smul.u32 6, %s26
        %s231 = smul.u32 96, %s26
        %s232 = smul.u32 2, %s25
        %p234 = scmp.eq.s32.totalorder %s26, 0
        // Predicated region
        $region41: #{tpu_custom_call.1} parent=31 // pred_check
          %p235 = pneg %p234
        $region42: #{tpu_custom_call.1} parent=31 // pred_check_branch
          %237 = sbr.rel (%p235) target = $region44
        $region43: #{tpu_custom_call.1} parent=31 // pred_region
          %238 = vst [vmem:[#allocation2] sm:$0xff] 0.0
          %239 = vst [vmem:[#allocation2 + $0x8] sm:$0xff] 0.0
        $region44: #{tpu_custom_call.1} parent=31 // pred_fallthru
          _
        %v240 = vld [vmem:[#allocation2] sm:$0xff]
        %v241 = vld [vmem:[#allocation2 + $0x8] sm:$0xff]
        %v242 = vld [vmem:[%s202] sm:$0xff]
        %v243 = vld [vmem:[%s202 + $0x8] sm:$0xff]
        %v244 = vld [vmem:[%s202 + $0x10] sm:$0xff]
        %v245 = vld [vmem:[%s202 + $0x18] sm:$0xff]
        %v246 = vld [vmem:[%s202 + $0x20] sm:$0xff]
        %v247 = vld [vmem:[%s202 + $0x28] sm:$0xff]
        %v248 = vld [vmem:[%s202 + $0x30] sm:$0xff]
        %v249 = vld [vmem:[%s202 + $0x38] sm:$0xff]
        %v250 = vld [vmem:[%s202 + $0x40] sm:$0xff]
        %v251 = vld [vmem:[%s202 + $0x48] sm:$0xff]
        %v252 = vld [vmem:[%s202 + $0x50] sm:$0xff]
        %v253 = vld [vmem:[%s202 + $0x58] sm:$0xff]
        %v254 = vpack.c.bf16 %v248, %v242
        %v255 = vpack.c.bf16 %v249, %v243
        %v256 = vpack.c.bf16 %v250, %v244
        %v257 = vpack.c.bf16 %v251, %v245
        %v258 = vpack.c.bf16 %v252, %v246
        %v259 = vpack.c.bf16 %v253, %v247
        %v260 = vld [vmem:[#allocation6] sm:$0xf]
        %v261 = vld [vmem:[#allocation6 + $0x4] sm:$0xf]
        %v262 = vld [vmem:[#allocation6 + $0x8] sm:$0xf]
        %v263 = vld [vmem:[#allocation6 + $0xc] sm:$0xf]
        %v264 = vld [vmem:[#allocation6 + $0x10] sm:$0xf]
        %v265 = vld [vmem:[#allocation6 + $0x14] sm:$0xf]
        %v266 = vld [vmem:[#allocation6 + $0x18] sm:$0xf]
        %v267 = vld [vmem:[#allocation6 + $0x1c] sm:$0xf]
        %v268 = vld [vmem:[#allocation6 + $0x20] sm:$0xf]
        %v269 = vld [vmem:[#allocation6 + $0x24] sm:$0xf]
        %v270 = vld [vmem:[#allocation6 + $0x28] sm:$0xf]
        %v271 = vld [vmem:[#allocation6 + $0x2c] sm:$0xf]
        %v272 = vld [vmem:[#allocation6 + $0x30] sm:$0xf]
        %v273 = vld [vmem:[#allocation6 + $0x34] sm:$0xf]
        %v274 = vld [vmem:[#allocation6 + $0x38] sm:$0xf]
        %v275 = vld [vmem:[#allocation6 + $0x3c] sm:$0xf]
        %v276 = vld [vmem:[#allocation6 + $0x40] sm:$0xf]
        %v277 = vld [vmem:[#allocation6 + $0x44] sm:$0xf]
        %v278 = vld [vmem:[#allocation6 + $0x48] sm:$0xf]
        %v279 = vld [vmem:[#allocation6 + $0x4c] sm:$0xf]
        %v280 = vld [vmem:[#allocation6 + $0x50] sm:$0xf]
        %v281 = vld [vmem:[#allocation6 + $0x54] sm:$0xf]
        %v282 = vld [vmem:[#allocation6 + $0x58] sm:$0xf]
        %v283 = vld [vmem:[#allocation6 + $0x5c] sm:$0xf]
        %v284 = vld [vmem:[#allocation6 + $0x60] sm:$0xf]
        %v285 = vld [vmem:[#allocation6 + $0x64] sm:$0xf]
        %v286 = vld [vmem:[#allocation6 + $0x68] sm:$0xf]
        %v287 = vld [vmem:[#allocation6 + $0x6c] sm:$0xf]
        %v288 = vld [vmem:[#allocation6 + $0x70] sm:$0xf]
        %v289 = vld [vmem:[#allocation6 + $0x74] sm:$0xf]
        %v290 = vld [vmem:[#allocation6 + $0x78] sm:$0xf]
        %v291 = vld [vmem:[#allocation6 + $0x7c] sm:$0xf]
        %v292 = vld [vmem:[#allocation6 + $0x80] sm:$0xf]
        %v293 = vld [vmem:[#allocation6 + $0x84] sm:$0xf]
        %v294 = vld [vmem:[#allocation6 + $0x88] sm:$0xf]
        %v295 = vld [vmem:[#allocation6 + $0x8c] sm:$0xf]
        %v296 = vld [vmem:[#allocation6 + $0x90] sm:$0xf]
        %v297 = vld [vmem:[#allocation6 + $0x94] sm:$0xf]
        %v298 = vld [vmem:[#allocation6 + $0x98] sm:$0xf]
        %v299 = vld [vmem:[#allocation6 + $0x9c] sm:$0xf]
        %v300 = vld [vmem:[#allocation6 + $0xa0] sm:$0xf]
        %v301 = vld [vmem:[#allocation6 + $0xa4] sm:$0xf]
        %v302 = vld [vmem:[#allocation6 + $0xa8] sm:$0xf]
        %v303 = vld [vmem:[#allocation6 + $0xac] sm:$0xf]
        %v304 = vld [vmem:[#allocation6 + $0xb0] sm:$0xf]
        %v305 = vld [vmem:[#allocation6 + $0xb4] sm:$0xf]
        %v306 = vld [vmem:[#allocation6 + $0xb8] sm:$0xf]
        %v307 = vld [vmem:[#allocation6 + $0xbc] sm:$0xf]
        %v308 = vld [vmem:[#allocation6 + $0xc0] sm:$0xf]
        %v309 = vld [vmem:[#allocation6 + $0xc4] sm:$0xf]
        %v310 = vld [vmem:[#allocation6 + $0xc8] sm:$0xf]
        %v311 = vld [vmem:[#allocation6 + $0xcc] sm:$0xf]
        %v312 = vld [vmem:[#allocation6 + $0xd0] sm:$0xf]
        %v313 = vld [vmem:[#allocation6 + $0xd4] sm:$0xf]
        %v314 = vld [vmem:[#allocation6 + $0xd8] sm:$0xf]
        %v315 = vld [vmem:[#allocation6 + $0xdc] sm:$0xf]
        %v316 = vld [vmem:[#allocation6 + $0xe0] sm:$0xf]
        %v317 = vld [vmem:[#allocation6 + $0xe4] sm:$0xf]
        %v318 = vld [vmem:[#allocation6 + $0xe8] sm:$0xf]
        %v319 = vld [vmem:[#allocation6 + $0xec] sm:$0xf]
        %v320 = vld [vmem:[#allocation6 + $0xf0] sm:$0xf]
        %v321 = vld [vmem:[#allocation6 + $0xf4] sm:$0xf]
        %v322 = vld [vmem:[#allocation6 + $0xf8] sm:$0xf]
        %v323 = vld [vmem:[#allocation6 + $0xfc] sm:$0xf]
        %v324 = vld [vmem:[#allocation6 + $0x100] sm:$0xf]
        %v325 = vld [vmem:[#allocation6 + $0x104] sm:$0xf]
        %v326 = vld [vmem:[#allocation6 + $0x108] sm:$0xf]
        %v327 = vld [vmem:[#allocation6 + $0x10c] sm:$0xf]
        %v328 = vld [vmem:[#allocation6 + $0x110] sm:$0xf]
        %v329 = vld [vmem:[#allocation6 + $0x114] sm:$0xf]
        %v330 = vld [vmem:[#allocation6 + $0x118] sm:$0xf]
        %v331 = vld [vmem:[#allocation6 + $0x11c] sm:$0xf]
        %v332 = vld [vmem:[#allocation6 + $0x120] sm:$0xf]
        %v333 = vld [vmem:[#allocation6 + $0x124] sm:$0xf]
        %v334 = vld [vmem:[#allocation6 + $0x128] sm:$0xf]
        %v335 = vld [vmem:[#allocation6 + $0x12c] sm:$0xf]
        %v336 = vld [vmem:[#allocation6 + $0x130] sm:$0xf]
        %v337 = vld [vmem:[#allocation6 + $0x134] sm:$0xf]
        %v338 = vld [vmem:[#allocation6 + $0x138] sm:$0xf]
        %v339 = vld [vmem:[#allocation6 + $0x13c] sm:$0xf]
        %v340 = vld [vmem:[#allocation6 + $0x140] sm:$0xf]
        %v341 = vld [vmem:[#allocation6 + $0x144] sm:$0xf]
        %v342 = vld [vmem:[#allocation6 + $0x148] sm:$0xf]
        %v343 = vld [vmem:[#allocation6 + $0x14c] sm:$0xf]
        %v344 = vld [vmem:[#allocation6 + $0x150] sm:$0xf]
        %v345 = vld [vmem:[#allocation6 + $0x154] sm:$0xf]
        %v346 = vld [vmem:[#allocation6 + $0x158] sm:$0xf]
        %v347 = vld [vmem:[#allocation6 + $0x15c] sm:$0xf]
        %v348 = vld [vmem:[#allocation6 + $0x160] sm:$0xf]
        %v349 = vld [vmem:[#allocation6 + $0x164] sm:$0xf]
        %v350 = vld [vmem:[#allocation6 + $0x168] sm:$0xf]
        %v351 = vld [vmem:[#allocation6 + $0x16c] sm:$0xf]
        %v352 = vld [vmem:[#allocation6 + $0x170] sm:$0xf]
        %v353 = vld [vmem:[#allocation6 + $0x174] sm:$0xf]
        %v354 = vld [vmem:[#allocation6 + $0x178] sm:$0xf]
        %v355 = vld [vmem:[#allocation6 + $0x17c] sm:$0xf]
        %v452 = vunpack.c.l.b16 %v260
        %v453 = vunpack.c.l.b16 %v261
        %v454 = vunpack.c.l.b16 %v262
        %v455 = vunpack.c.l.b16 %v263
        %v456 = vunpack.c.l.b16 %v264
        %v457 = vunpack.c.l.b16 %v265
        %v458 = vunpack.c.l.b16 %v266
        %v459 = vunpack.c.l.b16 %v267
        %v460 = vunpack.c.l.b16 %v268
        %v461 = vunpack.c.l.b16 %v269
        %v462 = vunpack.c.l.b16 %v270
        %v463 = vunpack.c.l.b16 %v271
        %v464 = vunpack.c.l.b16 %v272
        %v465 = vunpack.c.l.b16 %v273
        %v466 = vunpack.c.l.b16 %v274
        %v467 = vunpack.c.l.b16 %v275
        %v468 = vunpack.c.l.b16 %v276
        %v469 = vunpack.c.l.b16 %v277
        %v470 = vunpack.c.l.b16 %v278
        %v471 = vunpack.c.l.b16 %v279
        %v472 = vunpack.c.l.b16 %v280
        %v473 = vunpack.c.l.b16 %v281
        %v474 = vunpack.c.l.b16 %v282
        %v475 = vunpack.c.l.b16 %v283
        %v476 = vunpack.c.l.b16 %v284
        %v477 = vunpack.c.l.b16 %v285
        %v478 = vunpack.c.l.b16 %v286
        %v479 = vunpack.c.l.b16 %v287
        %v480 = vunpack.c.l.b16 %v288
        %v481 = vunpack.c.l.b16 %v289
        %v482 = vunpack.c.l.b16 %v290
        %v483 = vunpack.c.l.b16 %v291
        %v484 = vunpack.c.l.b16 %v292
        %v485 = vunpack.c.l.b16 %v293
        %v486 = vunpack.c.l.b16 %v294
        %v487 = vunpack.c.l.b16 %v295
        %v488 = vunpack.c.l.b16 %v296
        %v489 = vunpack.c.l.b16 %v297
        %v490 = vunpack.c.l.b16 %v298
        %v491 = vunpack.c.l.b16 %v299
        %v492 = vunpack.c.l.b16 %v300
        %v493 = vunpack.c.l.b16 %v301
        %v494 = vunpack.c.l.b16 %v302
        %v495 = vunpack.c.l.b16 %v303
        %v496 = vunpack.c.l.b16 %v304
        %v497 = vunpack.c.l.b16 %v305
        %v498 = vunpack.c.l.b16 %v306
        %v499 = vunpack.c.l.b16 %v307
        %v500 = vunpack.c.l.b16 %v308
        %v501 = vunpack.c.l.b16 %v309
        %v502 = vunpack.c.l.b16 %v310
        %v503 = vunpack.c.l.b16 %v311
        %v504 = vunpack.c.l.b16 %v312
        %v505 = vunpack.c.l.b16 %v313
        %v506 = vunpack.c.l.b16 %v314
        %v507 = vunpack.c.l.b16 %v315
        %v508 = vunpack.c.l.b16 %v316
        %v509 = vunpack.c.l.b16 %v317
        %v510 = vunpack.c.l.b16 %v318
        %v511 = vunpack.c.l.b16 %v319
        %v512 = vunpack.c.l.b16 %v320
        %v513 = vunpack.c.l.b16 %v321
        %v514 = vunpack.c.l.b16 %v322
        %v515 = vunpack.c.l.b16 %v323
        %v516 = vunpack.c.l.b16 %v324
        %v517 = vunpack.c.l.b16 %v325
        %v518 = vunpack.c.l.b16 %v326
        %v519 = vunpack.c.l.b16 %v327
        %v520 = vunpack.c.l.b16 %v328
        %v521 = vunpack.c.l.b16 %v329
        %v522 = vunpack.c.l.b16 %v330
        %v523 = vunpack.c.l.b16 %v331
        %v524 = vunpack.c.l.b16 %v332
        %v525 = vunpack.c.l.b16 %v333
        %v526 = vunpack.c.l.b16 %v334
        %v527 = vunpack.c.l.b16 %v335
        %v528 = vunpack.c.l.b16 %v336
        %v529 = vunpack.c.l.b16 %v337
        %v530 = vunpack.c.l.b16 %v338
        %v531 = vunpack.c.l.b16 %v339
        %v532 = vunpack.c.l.b16 %v340
        %v533 = vunpack.c.l.b16 %v341
        %v534 = vunpack.c.l.b16 %v342
        %v535 = vunpack.c.l.b16 %v343
        %v536 = vunpack.c.l.b16 %v344
        %v537 = vunpack.c.l.b16 %v345
        %v538 = vunpack.c.l.b16 %v346
        %v539 = vunpack.c.l.b16 %v347
        %v540 = vunpack.c.l.b16 %v348
        %v541 = vunpack.c.l.b16 %v349
        %v542 = vunpack.c.l.b16 %v350
        %v543 = vunpack.c.l.b16 %v351
        %v544 = vunpack.c.l.b16 %v352
        %v545 = vunpack.c.l.b16 %v353
        %v546 = vunpack.c.l.b16 %v354
        %v547 = vunpack.c.l.b16 %v355
        %v548 = vpack.c.b16 %v453, %v452
        %v549 = vpack.c.b16 %v455, %v454
        %v550 = vpack.c.b16 %v457, %v456
        %v551 = vpack.c.b16 %v459, %v458
        %v552 = vpack.c.b16 %v461, %v460
        %v553 = vpack.c.b16 %v463, %v462
        %v554 = vpack.c.b16 %v465, %v464
        %v555 = vpack.c.b16 %v467, %v466
        %v556 = vpack.c.b16 %v469, %v468
        %v557 = vpack.c.b16 %v471, %v470
        %v558 = vpack.c.b16 %v473, %v472
        %v559 = vpack.c.b16 %v475, %v474
        %v560 = vpack.c.b16 %v477, %v476
        %v561 = vpack.c.b16 %v479, %v478
        %v562 = vpack.c.b16 %v481, %v480
        %v563 = vpack.c.b16 %v483, %v482
        %v564 = vpack.c.b16 %v485, %v484
        %v565 = vpack.c.b16 %v487, %v486
        %v566 = vpack.c.b16 %v489, %v488
        %v567 = vpack.c.b16 %v491, %v490
        %v568 = vpack.c.b16 %v493, %v492
        %v569 = vpack.c.b16 %v495, %v494
        %v570 = vpack.c.b16 %v497, %v496
        %v571 = vpack.c.b16 %v499, %v498
        %v572 = vpack.c.b16 %v501, %v500
        %v573 = vpack.c.b16 %v503, %v502
        %v574 = vpack.c.b16 %v505, %v504
        %v575 = vpack.c.b16 %v507, %v506
        %v576 = vpack.c.b16 %v509, %v508
        %v577 = vpack.c.b16 %v511, %v510
        %v578 = vpack.c.b16 %v513, %v512
        %v579 = vpack.c.b16 %v515, %v514
        %v580 = vpack.c.b16 %v517, %v516
        %v581 = vpack.c.b16 %v519, %v518
        %v582 = vpack.c.b16 %v521, %v520
        %v583 = vpack.c.b16 %v523, %v522
        %v584 = vpack.c.b16 %v525, %v524
        %v585 = vpack.c.b16 %v527, %v526
        %v586 = vpack.c.b16 %v529, %v528
        %v587 = vpack.c.b16 %v531, %v530
        %v588 = vpack.c.b16 %v533, %v532
        %v589 = vpack.c.b16 %v535, %v534
        %v590 = vpack.c.b16 %v537, %v536
        %v591 = vpack.c.b16 %v539, %v538
        %v592 = vpack.c.b16 %v541, %v540
        %v593 = vpack.c.b16 %v543, %v542
        %v594 = vpack.c.b16 %v545, %v544
        %v595 = vpack.c.b16 %v547, %v546
        %644 = vmatprep.subr.bf16.mxu0 0
        %645 = vmatpush1.bf16.msra.mxu0 %v555
        %646 = vmatprep.subr.bf16.mxu0 0
        %647 = vmatpush1.bf16.msra.mxu0 %v554
        %648 = vmatprep.subr.bf16.mxu0 0
        %649 = vmatpush1.bf16.msra.mxu0 %v553
        %650 = vmatprep.subr.bf16.mxu0 0
        %651 = vmatpush1.bf16.msra.mxu0 %v552
        %652 = vmatprep.subr.bf16.mxu0 0
        %653 = vmatpush1.bf16.msra.mxu0 %v551
        %654 = vmatprep.subr.bf16.mxu0 0
        %655 = vmatpush1.bf16.msra.mxu0 %v550
        %656 = vmatprep.subr.bf16.mxu0 0
        %657 = vmatpush1.bf16.msra.mxu0 %v549
        %658 = vmatprep.subr.bf16.mxu0 0
        %659 = vmatpush1.bf16.msra.mxu0 %v548
        %660 = vmatprep.subr.bf16.mxu0 0
        %661 = vmatpush2.bf16.msra.mxu0 %v563
        %662 = vmatprep.subr.bf16.mxu0 0
        %663 = vmatpush2.bf16.msra.mxu0 %v562
        %664 = vmatprep.subr.bf16.mxu0 0
        %665 = vmatpush2.bf16.msra.mxu0 %v561
        %666 = vmatprep.subr.bf16.mxu0 0
        %667 = vmatpush2.bf16.msra.mxu0 %v560
        %668 = vmatprep.subr.bf16.mxu0 0
        %669 = vmatpush2.bf16.msra.mxu0 %v559
        %670 = vmatprep.subr.bf16.mxu0 0
        %671 = vmatpush2.bf16.msra.mxu0 %v558
        %672 = vmatprep.subr.bf16.mxu0 0
        %673 = vmatpush2.bf16.msra.mxu0 %v557
        %674 = vmatprep.subr.bf16.mxu0 0
        %675 = vmatpush2.bf16.msra.mxu0 %v556
        %676 = vmatprep.mubr.bf16.mxu0 %v255
        %677 = vmatmul.mubr.bf16.gmra.mxu0 %v254
        %v678 = vpop.f32.mrf.mxu0
        %v679 = vadd.f32 0.0, %v678
        %v680 = vpop.f32.mrf.mxu0
        %v681 = vpop.f32.mrf.mxu0
        %v682 = vadd.f32 0.0, %v681
        %v683 = vpop.f32.mrf.mxu0
        %684 = vdwg.mxu0
        %685 = vmatprep.subr.bf16.mxu0 0
        %686 = vmatpush1.bf16.msra.mxu0 %v571
        %687 = vmatprep.subr.bf16.mxu0 0
        %688 = vmatpush1.bf16.msra.mxu0 %v570
        %689 = vmatprep.subr.bf16.mxu0 0
        %690 = vmatpush1.bf16.msra.mxu0 %v569
        %691 = vmatprep.subr.bf16.mxu0 0
        %692 = vmatpush1.bf16.msra.mxu0 %v568
        %693 = vmatprep.subr.bf16.mxu0 0
        %694 = vmatpush1.bf16.msra.mxu0 %v567
        %695 = vmatprep.subr.bf16.mxu0 0
        %696 = vmatpush1.bf16.msra.mxu0 %v566
        %697 = vmatprep.subr.bf16.mxu0 0
        %698 = vmatpush1.bf16.msra.mxu0 %v565
        %699 = vmatprep.subr.bf16.mxu0 0
        %700 = vmatpush1.bf16.msra.mxu0 %v564
        %701 = vmatprep.subr.bf16.mxu0 0
        %702 = vmatpush2.bf16.msra.mxu0 %v579
        %703 = vmatprep.subr.bf16.mxu0 0
        %704 = vmatpush2.bf16.msra.mxu0 %v578
        %705 = vmatprep.subr.bf16.mxu0 0
        %706 = vmatpush2.bf16.msra.mxu0 %v577
        %707 = vmatprep.subr.bf16.mxu0 0
        %708 = vmatpush2.bf16.msra.mxu0 %v576
        %709 = vmatprep.subr.bf16.mxu0 0
        %710 = vmatpush2.bf16.msra.mxu0 %v575
        %711 = vmatprep.subr.bf16.mxu0 0
        %712 = vmatpush2.bf16.msra.mxu0 %v574
        %713 = vmatprep.subr.bf16.mxu0 0
        %714 = vmatpush2.bf16.msra.mxu0 %v573
        %715 = vmatprep.subr.bf16.mxu0 0
        %716 = vmatpush2.bf16.msra.mxu0 %v572
        %717 = vmatprep.mubr.bf16.mxu0 %v257
        %718 = vmatmul.mubr.bf16.gmra.mxu0 %v256
        %v719 = vpop.f32.mrf.mxu0
        %v720 = vadd.f32 %v679, %v719
        %v721 = vpop.f32.mrf.mxu0
        %v722 = vpop.f32.mrf.mxu0
        %v723 = vadd.f32 %v682, %v722
        %v724 = vpop.f32.mrf.mxu0
        %725 = vdwg.mxu0
        %726 = vmatprep.subr.bf16.mxu0 0
        %727 = vmatpush1.bf16.msra.mxu0 %v587
        %728 = vmatprep.subr.bf16.mxu0 0
        %729 = vmatpush1.bf16.msra.mxu0 %v586
        %730 = vmatprep.subr.bf16.mxu0 0
        %731 = vmatpush1.bf16.msra.mxu0 %v585
        %732 = vmatprep.subr.bf16.mxu0 0
        %733 = vmatpush1.bf16.msra.mxu0 %v584
        %734 = vmatprep.subr.bf16.mxu0 0
        %735 = vmatpush1.bf16.msra.mxu0 %v583
        %736 = vmatprep.subr.bf16.mxu0 0
        %737 = vmatpush1.bf16.msra.mxu0 %v582
        %738 = vmatprep.subr.bf16.mxu0 0
        %739 = vmatpush1.bf16.msra.mxu0 %v581
        %740 = vmatprep.subr.bf16.mxu0 0
        %741 = vmatpush1.bf16.msra.mxu0 %v580
        %742 = vmatprep.subr.bf16.mxu0 0
        %743 = vmatpush2.bf16.msra.mxu0 %v595
        %744 = vmatprep.subr.bf16.mxu0 0
        %745 = vmatpush2.bf16.msra.mxu0 %v594
        %746 = vmatprep.subr.bf16.mxu0 0
        %747 = vmatpush2.bf16.msra.mxu0 %v593
        %748 = vmatprep.subr.bf16.mxu0 0
        %749 = vmatpush2.bf16.msra.mxu0 %v592
        %750 = vmatprep.subr.bf16.mxu0 0
        %751 = vmatpush2.bf16.msra.mxu0 %v591
        %752 = vmatprep.subr.bf16.mxu0 0
        %753 = vmatpush2.bf16.msra.mxu0 %v590
        %754 = vmatprep.subr.bf16.mxu0 0
        %755 = vmatpush2.bf16.msra.mxu0 %v589
        %756 = vmatprep.subr.bf16.mxu0 0
        %757 = vmatpush2.bf16.msra.mxu0 %v588
        %758 = vmatprep.mubr.bf16.mxu0 %v259
        %759 = vmatmul.mubr.bf16.gmra.mxu0 %v258
        %v760 = vpop.f32.mrf.mxu0
        %v761 = vadd.f32 %v720, %v760
        %v762 = vpop.f32.mrf.mxu0
        %v763 = vpop.f32.mrf.mxu0
        %v764 = vadd.f32 %v723, %v763
        %v765 = vpop.f32.mrf.mxu0
        %766 = vdwg.mxu0
        %v767 = vadd.f32 %v240, %v761
        %v768 = vadd.f32 %v241, %v764
        %769 = vst [vmem:[#allocation2] sm:$0xff] %v767
        %770 = vst [vmem:[#allocation2 + $0x8] sm:$0xff] %v768
        // Predicated region
        $region45: #{tpu_custom_call.1} parent=31 // pred_check
          %p771 = pneg %p234
        $region46: #{tpu_custom_call.1} parent=31 // pred_check_branch
          %773 = sbr.rel (%p771) target = $region48
        $region47: #{tpu_custom_call.1} parent=31 // pred_region
          %v774 = vld [vmem:[#allocation2] sm:$0xff]
          %v775 = vld [vmem:[#allocation2 + $0x8] sm:$0xff]
          %v776 = vld [vmem:[%s2] sm:$0x1]
          %v778 = vlaneseq
          %v779 = vshrl.u32 %v778, 7
          %v780 = vsub.s32 0, %v779
          %v781 = vrot.slane %v776, %v780
          %v783 = vadd.f32 %v774, %v781
          %v784 = vadd.f32 %v775, %v781
          %v785 = vmax.f32 %v783, 0.0
          %v786 = vmax.f32 %v784, 0.0
          %v787 = vmul.f32 %v785, %v785
          %v788 = vmul.f32 %v786, %v786
          %789 = vadd.xlane.f32.xlu0 %v787
          %v790 = vpop.xlane.xlu0 %789
          %791 = vadd.xlane.f32.xlu0 %v788
          %v792 = vpop.xlane.xlu0 %791
          %v793 = vadd.f32 %v790, 1e-12
          %v794 = vadd.f32 %v792, 1e-12
          %v795 = vrsqrt.pop %v793
          %v796 = vrsqrt.pop %v794
          %v797 = vmul.f32 %v785, %v795
          %v798 = vmul.f32 %v786, %v796
          %v799 = vpack.c.bf16 %v798, %v797
          %v801 = vunpack.c.l.b16 %v799
          %v802 = vunpack.c.h.b16 %v799
          %v803 = vpack.c.b16 %v801, %v801
          %v804 = vpack.c.b16 %v802, %v802
          %807 = vst [vmem:[%s228] sm:$0xf] %v803
          %808 = vst [vmem:[%s228 + $0x4] sm:$0xf] %v804
        $region48: #{tpu_custom_call.1} parent=31 // pred_fallthru
          _
        %s809 = sand.u32 %s116, 1
        %s810 = scalar_lea.sflag [#allocation5], %s809
        %s811 = sand.u32 %s116, 1
        %s812 = smul.addr %s811, 8
        %s813 = scalar_lea.vmem [#allocation8], %s812
        // Predicated region
        $region49: #{tpu_custom_call.1} parent=31 // pred_check
          %p814 = pneg %p126
        $region50: #{tpu_custom_call.1} parent=31 // pred_check_branch
          %816 = sbr.rel (%p814) target = $region52
        $region51: #{tpu_custom_call.1} parent=31 // pred_region
          %s817 = smul.u32 2, %s25
          %s819 = ssub.s32 128, 128
          %820 = vsyncadd %s810, %s819
          %s821 = smul.addr %s817, 64
          %s822 = scalar_lea.hbm %s3, %s821
          %s823 = sshll.u32 %s813, 4
          %s824 = int_to_ptr.vmem [resolvable:$true] %s823
          %829 = dma.vmem_to_hbm [thread:$0]  %s824, 128, %s822, %s810, 64, 64, 4
        $region52: #{tpu_custom_call.1} parent=31 // pred_fallthru
          _
      $region32: #{tpu_custom_call.1} parent=5 // pred_fallthru
        _
      %p830 = scmp.le.s32.totalorder 2, %s16
      // Predicated region
      $region53: #{tpu_custom_call.1} parent=5 // pred_check
        %p831 = pneg %p830
      $region54: #{tpu_custom_call.1} parent=5 // pred_check_branch
        %833 = sbr.rel (%p831) target = $region56
      $region55: #{tpu_custom_call.1} parent=5 // pred_region
        %s834 = ssub.s32 %s16, 2
        // Predicated region
        $region57: #{tpu_custom_call.1} parent=55 // pred_check
          %p835 = pneg %p132
        $region58: #{tpu_custom_call.1} parent=55 // pred_check_branch
          %837 = sbr.rel (%p835) target = $region60
        $region59: #{tpu_custom_call.1} parent=55 // pred_region
          %s838 = sand.u32 %s117, 1
          %s839 = scalar_lea.sflag [#allocation5], %s838
          %s840 = sand.u32 %s117, 1
          %s841 = smul.addr %s840, 8
          %s842 = scalar_lea.vmem [#allocation8], %s841
          %843 = dma.done %s839, 128
        $region60: #{tpu_custom_call.1} parent=55 // pred_fallthru
          _
      $region56: #{tpu_custom_call.1} parent=5 // pred_fallthru
        _
    $region6: #{tpu_custom_call.1} parent=1 // loop_footer
      %s20 = sadd.s32 1, %s16
    $region7: #{tpu_custom_call.1} parent=1 // loop_footer_branch
      %15 = sbr.rel target = $region3
    $region8: #{tpu_custom_call.1} parent=1 // loop_exit
      _
    %844 = vsyncpa [#allocation4], 1
    %s845 = scalar_lea.sflag [#allocation4], 1
    %846 = vsyncpa %s845, 1
    %847 = vsyncpa [#allocation7], 1
    %848 = vsyncpa [#allocation5], 1
    %s849 = scalar_lea.sflag [#allocation5], 1
    %850 = vsyncpa %s849, 1

</llo_original>
